<compile_context>
chip_gen: v5e
topology: v5e:2x2
jax: 0.10.0
libtpu: 0.0.40
codegen_flags: <defaults>
</compile_context>

<pallas_src>
import jax
import jax.numpy as jnp
from jax.experimental import pallas as pl
from jax.experimental.pallas import tpu as pltpu

BN_EPS = 1e-5
F_IN, F_H0, F_H1 = 1024, 512, 256


# ---------------------------------------------------------------------------
# Pass 1: batch statistics (sum, sum of squares) accumulated over batch tiles.
# ---------------------------------------------------------------------------
def bn_stats_kernel(x_ref, sum_ref, sumsq_ref):
    @pl.when(pl.program_id(0) == 0)
    def _():
        sum_ref[...] = jnp.zeros_like(sum_ref)
        sumsq_ref[...] = jnp.zeros_like(sumsq_ref)

    x = x_ref[...].astype(jnp.float32)                       # (TB, 1024)
    sum_ref[...] += jnp.sum(x, axis=0, keepdims=True)        # (1, 1024)
    sumsq_ref[...] += jnp.sum(x * x, axis=0, keepdims=True)  # (1, 1024)


# ---------------------------------------------------------------------------
# Pass 2: normalize + affine + linear chain + residual + ReLU, per batch tile.
# ---------------------------------------------------------------------------
def foo1_main_kernel(x_ref, mean_ref, var_ref, gamma_ref, beta_ref,
                     w0_ref, b0_ref, w1_ref, b1_ref, w2_ref, b2_ref,
                     o_ref):
    x = x_ref[...].astype(jnp.float32)                        # (TB, 1024)

    # BatchNorm (training mode: biased batch stats, computed in pass 1)
    inv_std = jax.lax.rsqrt(var_ref[...] + BN_EPS)            # (1, 1024)
    xn = (x - mean_ref[...]) * inv_std * gamma_ref[...] + beta_ref[...]

    # Linear chain on the MXU: bf16 inputs, f32 accumulation.
    h0 = jnp.dot(xn.astype(jnp.bfloat16), w0_ref[...],
                 preferred_element_type=jnp.float32) + b0_ref[...]   # (TB, 512)
    h1 = jnp.dot(h0.astype(jnp.bfloat16), w1_ref[...],
                 preferred_element_type=jnp.float32) + b1_ref[...]   # (TB, 256)
    h2 = jnp.dot(h1.astype(jnp.bfloat16), w2_ref[...],
                 preferred_element_type=jnp.float32) + b2_ref[...]   # (TB, 1024)

    # Residual (with the batchnorm output) + ReLU
    o_ref[...] = jnp.maximum(xn + h2, 0.0).astype(o_ref.dtype)


def _pick_batch_tile(B, preferred):
    """Largest tile <= preferred that divides B (keeps blocks (8,128)-friendly)."""
    if B <= preferred:
        return B
    for tb in (preferred, 256, 128, 64, 32, 16, 8):
        if tb <= preferred and B % tb == 0:
            return tb
    return B  # fallback: single full-array block


def foo1_forward(x, params, *, tile_b=256):
    """x: (B, 1024) float32. params: dict of gamma/beta/w0/b0/w1/b1/w2/b2 (f32)."""
    B, F = x.shape
    assert F == F_IN
    tb = _pick_batch_tile(B, tile_b)
    nb = B // tb

    # -------- pass 1: batch mean / variance --------
    bsum, bsumsq = pl.pallas_call(
        bn_stats_kernel,
        out_shape=(jax.ShapeDtypeStruct((1, F), jnp.float32),
                   jax.ShapeDtypeStruct((1, F), jnp.float32)),
        grid=(nb,),
        in_specs=[pl.BlockSpec((tb, F), lambda i: (i, 0))],
        out_specs=(pl.BlockSpec((1, F), lambda i: (0, 0)),
                   pl.BlockSpec((1, F), lambda i: (0, 0))),
        compiler_params=pltpu.CompilerParams(
            dimension_semantics=("arbitrary",)),
    )(x)
    mean = bsum * (1.0 / B)
    var = jnp.maximum(bsumsq * (1.0 / B) - mean * mean, 0.0)  # biased batch variance

    # bf16 weights: they are ~95% of HBM traffic in the small-batch regime.
    w0 = params["w0"].astype(jnp.bfloat16)
    w1 = params["w1"].astype(jnp.bfloat16)
    w2 = params["w2"].astype(jnp.bfloat16)

    flops = 2 * B * (F_IN * F_H0 + F_H0 * F_H1 + F_H1 * F_IN)
    bytes_accessed = ((w0.size + w1.size + w2.size) * 2      # bf16 weights
                      + 2 * B * F_IN * 4                     # x in, y out (f32)
                      + 8 * F_IN * 4)                        # bn params / stats / biases

    # Constant index_map => weights/biases/BN-params stay VMEM-resident across batch tiles.
    const = lambda a: pl.BlockSpec(a.shape, lambda i: (0,) * a.ndim)
    tiled = pl.BlockSpec((tb, F), lambda i: (i, 0))

    return pl.pallas_call(
        foo1_main_kernel,
        out_shape=jax.ShapeDtypeStruct((B, F), jnp.float32),
        grid=(nb,),
        in_specs=[
            tiled,                                   # x (batch-tiled)
            const(mean), const(var),                 # BN statistics
            const(params["gamma"]), const(params["beta"]),
            const(w0), const(params["b0"]),
            const(w1), const(params["b1"]),
            const(w2), const(params["b2"]),
        ],
        out_specs=tiled,
        compiler_params=pltpu.CompilerParams(
            dimension_semantics=("parallel",)),      # shard batch tiles across TCs
        cost_estimate=pl.CostEstimate(
            flops=flops, transcendentals=0, bytes_accessed=bytes_accessed),
    )(x, mean, var, params["gamma"], params["beta"],
      w0, params["b0"], w1, params["b1"], w2, params["b2"])


def make_params(key):
    """Deterministic synthetic parameters matching Foo1's shapes.

    Linear weights are stored as (in, out) -- transposed relative to PyTorch's
    (out, in) -- so the kernel computes x @ W + b directly.
    """
    ks = jax.random.split(key, 8)

    def lin(kw, kb, fan_in, fan_out):
        bound = 1.0 / jnp.sqrt(fan_in)
        w = jax.random.uniform(kw, (fan_in, fan_out), jnp.float32, -bound, bound)
        b = jax.random.uniform(kb, (1, fan_out), jnp.float32, -bound, bound)
        return w, b

    w0, b0 = lin(ks[0], ks[1], F_IN, F_H0)
    w1, b1 = lin(ks[2], ks[3], F_H0, F_H1)
    w2, b2 = lin(ks[4], ks[5], F_H1, F_IN)
    # PyTorch default BN init is gamma=1, beta=0; randomize slightly so the
    # affine path is actually exercised by the correctness check.
    gamma = 1.0 + 0.1 * jax.random.normal(ks[6], (1, F_IN), jnp.float32)
    beta = 0.1 * jax.random.normal(ks[7], (1, F_IN), jnp.float32)
    return {"gamma": gamma, "beta": beta,
            "w0": w0, "b0": b0, "w1": w1, "b1": b1, "w2": w2, "b2": b2}


def foo1_reference(x, p):
    """Pure f32 JAX reference (matches PyTorch Foo1 forward in training mode)."""
    mean = jnp.mean(x, axis=0, keepdims=True)
    var = jnp.mean((x - mean) ** 2, axis=0, keepdims=True)
    xn = (x - mean) / jnp.sqrt(var + BN_EPS) * p["gamma"] + p["beta"]
    h0 = xn @ p["w0"] + p["b0"]
    h1 = h0 @ p["w1"] + p["b1"]
    h2 = h1 @ p["w2"] + p["b2"]
    return jnp.maximum(xn + h2, 0.0)


if __name__ == "__main__":
    key = jax.random.PRNGKey(0)
    kx, kp = jax.random.split(key)
    B = 256  # feature dims (1024/512/256) are fixed by the module
    x = jax.random.normal(kx, (B, F_IN), jnp.float32)
    params = make_params(kp)

    # tile_b=128 -> 2 batch tiles: exercises the tiled grid + resident weights.
    out = foo1_forward(x, params, tile_b=128)
    out = jax.block_until_ready(out)

    ref = foo1_reference(x, params)
    assert out.shape == (B, F_IN)
    # Tolerance accounts for bf16 weights/activations feeding the MXU (f32 accumulation).
    assert jnp.allclose(out, ref, atol=2e-2, rtol=2e-2), (
        "mismatch vs JAX reference, max abs diff = %g"
        % float(jnp.max(jnp.abs(out - ref))))
    print("KERNEL_OK")
</pallas_src>

<mosaic_0001>
module attributes {stable_mosaic.version = 11 : i64} {
  func.func @bn_stats_kernel(%arg0: i32, %arg1: memref<128x1024xf32, #tpu.memory_space<vmem>>, %arg2: memref<1x1024xf32, #tpu.memory_space<vmem>>, %arg3: memref<1x1024xf32, #tpu.memory_space<vmem>>) attributes {dimension_semantics = [#tpu.dimension_semantics<arbitrary>], iteration_bounds = array<i64: 2>, scalar_prefetch = 0 : i64, scratch_operands = 0 : i64, tpu.core_type = #tpu.core_type<tc>, window_params = [{transform_indices = @transform_0, window_bounds = array<i64: 128, 1024>}, {pipeline_mode = #tpu.pipeline_mode<synchronous>, transform_indices = @transform_1, window_bounds = array<i64: 1, 1024>}, {pipeline_mode = #tpu.pipeline_mode<synchronous>, transform_indices = @transform_2, window_bounds = array<i64: 1, 1024>}]} {
    %c0_i32 = arith.constant 0 : i32
    %0 = arith.cmpi eq, %arg0, %c0_i32 : i32
    %1 = arith.extui %0 : i1 to i32
    %c0_i32_0 = arith.constant 0 : i32
    %2 = arith.cmpi ne, %1, %c0_i32_0 : i32
    scf.if %2 {
      %cst_11 = arith.constant 0.000000e+00 : f32
      %15 = vector.broadcast %cst_11 : f32 to vector<1x1024xf32>
      %c0_12 = arith.constant 0 : index
      %c0_13 = arith.constant 0 : index
      %16 = vector.load %arg2[%c0_12, %c0_13] : memref<1x1024xf32, #tpu.memory_space<vmem>>, vector<1x1024xf32>
      tpu.vector_store %arg2[%c0_12, %c0_13], %15 {strides = array<i32>} : memref<1x1024xf32, #tpu.memory_space<vmem>>, vector<1x1024xf32>,
      %cst_14 = arith.constant 0.000000e+00 : f32
      %17 = vector.broadcast %cst_14 : f32 to vector<1x1024xf32>
      %c0_15 = arith.constant 0 : index
      %c0_16 = arith.constant 0 : index
      %18 = vector.load %arg3[%c0_15, %c0_16] : memref<1x1024xf32, #tpu.memory_space<vmem>>, vector<1x1024xf32>
      tpu.vector_store %arg3[%c0_15, %c0_16], %17 {strides = array<i32>} : memref<1x1024xf32, #tpu.memory_space<vmem>>, vector<1x1024xf32>,
    } else {
    }
    %c0 = arith.constant 0 : index
    %c0_1 = arith.constant 0 : index
    %3 = vector.load %arg1[%c0, %c0_1] : memref<128x1024xf32, #tpu.memory_space<vmem>>, vector<128x1024xf32>
    %c0_2 = arith.constant 0 : index
    %c0_3 = arith.constant 0 : index
    %4 = vector.load %arg2[%c0_2, %c0_3] : memref<1x1024xf32, #tpu.memory_space<vmem>>, vector<1x1024xf32>
    %cst = arith.constant dense<0.000000e+00> : vector<1024xf32>
    %5 = vector.multi_reduction <add>, %3, %cst [0] : vector<128x1024xf32> to vector<1024xf32>
    %6 = vector.shape_cast %5 : vector<1024xf32> to vector<1x1024xf32>
    %7 = arith.addf %4, %6 : vector<1x1024xf32>
    %c0_4 = arith.constant 0 : index
    %c0_5 = arith.constant 0 : index
    %8 = vector.load %arg2[%c0_4, %c0_5] : memref<1x1024xf32, #tpu.memory_space<vmem>>, vector<1x1024xf32>
    tpu.vector_store %arg2[%c0_4, %c0_5], %7 {strides = array<i32>} : memref<1x1024xf32, #tpu.memory_space<vmem>>, vector<1x1024xf32>,
    %c0_6 = arith.constant 0 : index
    %c0_7 = arith.constant 0 : index
    %9 = vector.load %arg3[%c0_6, %c0_7] : memref<1x1024xf32, #tpu.memory_space<vmem>>, vector<1x1024xf32>
    %10 = arith.mulf %3, %3 : vector<128x1024xf32>
    %cst_8 = arith.constant dense<0.000000e+00> : vector<1024xf32>
    %11 = vector.multi_reduction <add>, %10, %cst_8 [0] : vector<128x1024xf32> to vector<1024xf32>
    %12 = vector.shape_cast %11 : vector<1024xf32> to vector<1x1024xf32>
    %13 = arith.addf %9, %12 : vector<1x1024xf32>
    %c0_9 = arith.constant 0 : index
    %c0_10 = arith.constant 0 : index
    %14 = vector.load %arg3[%c0_9, %c0_10] : memref<1x1024xf32, #tpu.memory_space<vmem>>, vector<1x1024xf32>
    tpu.vector_store %arg3[%c0_9, %c0_10], %13 {strides = array<i32>} : memref<1x1024xf32, #tpu.memory_space<vmem>>, vector<1x1024xf32>,
    return
  }
  func.func @transform_0(%arg0: i32) -> (i32, i32) {
    %c0_i32 = arith.constant 0 : i32
    %c0_i32_0 = arith.constant 0 : i32
    return %arg0, %c0_i32 : i32, i32
  }
  func.func @transform_1(%arg0: i32) -> (i32, i32) {
    %c0_i32 = arith.constant 0 : i32
    %c0_i32_0 = arith.constant 0 : i32
    %c0_i32_1 = arith.constant 0 : i32
    return %c0_i32, %c0_i32_0 : i32, i32
  }
  func.func @transform_2(%arg0: i32) -> (i32, i32) {
    %c0_i32 = arith.constant 0 : i32
    %c0_i32_0 = arith.constant 0 : i32
    %c0_i32_1 = arith.constant 0 : i32
    return %c0_i32, %c0_i32_0 : i32, i32
  }
}

</mosaic_0001>

<llo_original>
// kernel: tpu_custom_call.1
$region0: #{tpu_custom_call.1}
  #allocation0 [shape = 'u32[]', space=smem, size = 0x4, offset = 0x4, fixed_abs, tag = 'smem constant byte address 0x4 - core index']
  #allocation1 [shape = 'u32[72,128]{1,0:T(1,128)}', space=vmem, size = 0x9000, scoped, tag = 'internal scratch']
  %s0 = inlined_call_operand.hbm [shape: f32[256,1024], index: 0, kind: input, shape index: {}]
  %s1 = inlined_call_operand.hbm [shape: f32[1,1024], index: 1, kind: output, shape index: {0}]
  %s2 = inlined_call_operand.hbm [shape: f32[1,1024], index: 2, kind: output, shape index: {1}]
  %3 = xla_tuple %s1, %s2
  %s4 = sld [smem:[#allocation0]]
  $region53: #{tpu_custom_call.1} parent=0
    _
  %s6 = ssub.s32 1, %s4
  %s7 = scalar_select 0, %s6, %s4
  $region1: #{tpu_custom_call.1} parent=0
    #allocation2 [shape = 'u8[1048576]{0}', space=vmem, size = 0x100000, scoped, tag = 'input window, operand 0']
    #allocation3 [shape = 's32[2]{0}', space=sflag, size = 0x8, scoped, tag = 'scoped memory for tpu_custom_call.1']
    #allocation4 [shape = 's32[2]{0}', space=sflag, size = 0x8, scoped, tag = 'scoped memory for tpu_custom_call.1']
    #allocation5 [shape = 'u8[4096]{0}', space=vmem, size = 0x1000, scoped, tag = 'output window, operand 0, single buffered']
    #allocation6 [shape = 'u8[4096]{0}', space=vmem, size = 0x1000, scoped, tag = 'output window, operand 1, single buffered']
    #allocation7 [shape = 's32[1]{0}', space=sflag, size = 0x4, scoped, tag = 'scoped memory for tpu_custom_call.1']
    %8 = vsyncpa [#allocation3], 0
    %s9 = scalar_lea.sflag [#allocation3], 1
    %10 = vsyncpa %s9, 0
    %11 = vsyncpa [#allocation4], 0
    %12 = vsyncpa [#allocation7], 0
    loop: start=0, step=1, limit=4
    $region2: #{tpu_custom_call.1} parent=1 // loop_pre_header
      _
    $region3: #{tpu_custom_call.1} parent=1 // loop_header
      %s14 = sphi 0, %s18
      %p15 = scmp.ge.s32.totalorder %s14, 4
      %s24 = sphi 0, %s26
      %s27 = sphi 0, %s24
      %s28 = sphi 0, %s27
      %s44 = sphi 0, %s28
      %s48 = sphi 0, %s48
      %s50 = sphi 0, %s48
      %s51 = sphi 0, %s50
      %s65 = sphi 0, %s51
      %s69 = sphi 0, %s69
      %s71 = sphi 0, %s69
      %s72 = sphi 0, %s71
      %s86 = sphi 0, %s72
    $region4: #{tpu_custom_call.1} parent=1 // loop_header_branch
      %17 = sbr.rel (%p15) target = $region8
    $region5: #{tpu_custom_call.1} parent=1 // loop_body
      %s19 = ssub.s32 %s14, 1
      %s20 = ssub.s32 %s14, 2
      %s21 = sadd.s32 %s14, 1
      %s22 = ssub.s32 %s14, %s21
      %p23 = scmp.eq.s32.totalorder %s22, 0
      %s25 = sadd.s32 %s24, 1
      %s26 = scalar_select %p23, %s24, %s25
      %p29 = pneg %p23
      %p30 = scmp.eq.s32.totalorder %s14, 1
      %p31 = por %p29, %p30
      %p32 = scmp.ne.s32.totalorder %s24, %s27
      %p33 = scmp.eq.s32.totalorder %s14, 0
      %p34 = por %p32, %p33
      %p35 = scmp.ne.s32.totalorder %s24, %s27
      %p36 = scmp.eq.s32.totalorder %s19, 1
      %p37 = por %p35, %p36
      %p38 = scmp.ne.s32.totalorder %s27, %s28
      %p39 = scmp.eq.s32.totalorder %s19, 0
      %p40 = por %p38, %p39
      %p41 = scmp.ne.s32.totalorder %s27, %s28
      %p42 = scmp.eq.s32.totalorder %s20, 1
      %p43 = por %p41, %p42
      %p45 = scmp.ne.s32.totalorder %s28, %s44
      %p46 = scmp.eq.s32.totalorder %s20, 0
      %p47 = por %p45, %p46
      %s49 = sadd.s32 %s48, 1
      %p52 = scmp.eq.s32.totalorder %s14, 1
      %p53 = scmp.ne.s32.totalorder %s48, %s50
      %p54 = scmp.eq.s32.totalorder %s14, 0
      %p55 = por %p53, %p54
      %p56 = scmp.ne.s32.totalorder %s48, %s50
      %p57 = scmp.eq.s32.totalorder %s19, 1
      %p58 = por %p56, %p57
      %p59 = scmp.ne.s32.totalorder %s50, %s51
      %p60 = scmp.eq.s32.totalorder %s19, 0
      %p61 = por %p59, %p60
      %p62 = scmp.ne.s32.totalorder %s50, %s51
      %p63 = scmp.eq.s32.totalorder %s20, 1
      %p64 = por %p62, %p63
      %p66 = scmp.ne.s32.totalorder %s51, %s65
      %p67 = scmp.eq.s32.totalorder %s20, 0
      %p68 = por %p66, %p67
      %s70 = sadd.s32 %s69, 1
      %p73 = scmp.eq.s32.totalorder %s14, 1
      %p74 = scmp.ne.s32.totalorder %s69, %s71
      %p75 = scmp.eq.s32.totalorder %s14, 0
      %p76 = por %p74, %p75
      %p77 = scmp.ne.s32.totalorder %s69, %s71
      %p78 = scmp.eq.s32.totalorder %s19, 1
      %p79 = por %p77, %p78
      %p80 = scmp.ne.s32.totalorder %s71, %s72
      %p81 = scmp.eq.s32.totalorder %s19, 0
      %p82 = por %p80, %p81
      %p83 = scmp.ne.s32.totalorder %s71, %s72
      %p84 = scmp.eq.s32.totalorder %s20, 1
      %p85 = por %p83, %p84
      %p87 = scmp.ne.s32.totalorder %s72, %s86
      %p88 = scmp.eq.s32.totalorder %s20, 0
      %p89 = por %p87, %p88
      %p90 = scmp.le.s32.totalorder 1, %s14
      %p91 = scmp.lt.s32.totalorder %s14, 3
      %p92 = pnand %p90, %p91
      %p93 = pneg %p92
      // Predicated region
      $region9: #{tpu_custom_call.1} parent=5 // pred_check
        _
      $region10: #{tpu_custom_call.1} parent=5 // pred_check_branch
        %95 = sbr.rel (%p92) target = $region12
      $region11: #{tpu_custom_call.1} parent=5 // pred_region
        %s96 = ssub.s32 %s14, 1
      $region12: #{tpu_custom_call.1} parent=5 // pred_fallthru
        _
      %p97 = scmp.lt.s32.totalorder %s14, 2
      // Predicated region
      $region13: #{tpu_custom_call.1} parent=5 // pred_check
        %p98 = pneg %p97
      $region14: #{tpu_custom_call.1} parent=5 // pred_check_branch
        %100 = sbr.rel (%p98) target = $region16
      $region15: #{tpu_custom_call.1} parent=5 // pred_region
        // Predicated region
        $region17: #{tpu_custom_call.1} parent=15 // pred_check
          %p101 = pneg %p34
        $region18: #{tpu_custom_call.1} parent=15 // pred_check_branch
          %103 = sbr.rel (%p101) target = $region20
        $region19: #{tpu_custom_call.1} parent=15 // pred_region
          %s104 = sand.u32 %s24, 1
          %s105 = scalar_lea.sflag [#allocation3], %s104
          %s106 = sand.u32 %s24, 1
          %s107 = smul.addr %s106, 1024
          %s108 = scalar_lea.vmem [#allocation2], %s107
          %s109 = smul.u32 16, %s14
          %111 = vsyncadd %s105, 0
          %s112 = smul.addr %s109, 8
          %s113 = smul.addr %s112, 8
          %s114 = scalar_lea.hbm %s0, %s113
          %s115 = sshll.u32 %s114, 4
          %s116 = int_to_ptr.hbm [resolvable:$true] %s115
          %s117 = sshll.u32 %s108, 4
          %s118 = int_to_ptr.vmem [resolvable:$true] %s117
          %123 = dma.hbm_to_vmem [thread:$0]  %s116, 16384, %s118, %s105, 1024, 1024, 64
        $region20: #{tpu_custom_call.1} parent=15 // pred_fallthru
          _
      $region16: #{tpu_custom_call.1} parent=5 // pred_fallthru
        _
      %p124 = scmp.le.s32.totalorder 1, %s14
      %p125 = scmp.lt.s32.totalorder %s14, 3
      %p126 = pnand %p124, %p125
      %p127 = pneg %p126
      // Predicated region
      $region21: #{tpu_custom_call.1} parent=5 // pred_check
        _
      $region22: #{tpu_custom_call.1} parent=5 // pred_check_branch
        %129 = sbr.rel (%p126) target = $region24
      $region23: #{tpu_custom_call.1} parent=5 // pred_region
        %s130 = ssub.s32 %s14, 1
        %s131 = sand.u32 %s27, 1
        %s132 = scalar_lea.sflag [#allocation3], %s131
        %s133 = sand.u32 %s27, 1
        %s134 = smul.addr %s133, 1024
        %s135 = scalar_lea.vmem [#allocation2], %s134
        // Predicated region
        $region25: #{tpu_custom_call.1} parent=23 // pred_check
          %p136 = pneg %p40
        $region26: #{tpu_custom_call.1} parent=23 // pred_check_branch
          %138 = sbr.rel (%p136) target = $region28
        $region27: #{tpu_custom_call.1} parent=23 // pred_region
          %140 = dma.done %s132, 16384
        $region28: #{tpu_custom_call.1} parent=23 // pred_fallthru
          _
        %s141 = sand.u32 %s27, 1
        %s142 = scalar_lea.sflag [#allocation3], %s141
        %s143 = sand.u32 %s27, 1
        %s144 = smul.addr %s143, 1024
        %s145 = scalar_lea.vmem [#allocation2], %s144
        %p146 = pneg %p40
        %p147 = pneg %p37
        %p148 = pneg %p61
        %p149 = pneg %p58
        %p150 = pneg %p82
        %p151 = pneg %p79
        %s152 = smul.u32 16, %s19
        %p153 = scmp.eq.s32.totalorder %s19, 0
        // Predicated region
        $region29: #{tpu_custom_call.1} parent=23 // pred_check
          %p154 = pneg %p153
        $region30: #{tpu_custom_call.1} parent=23 // pred_check_branch
          %156 = sbr.rel (%p154) target = $region32
        $region31: #{tpu_custom_call.1} parent=23 // pred_region
          %157 = vst [vmem:[#allocation5] sm:$0xff] 0.0
          %158 = vst [vmem:[#allocation6] sm:$0xff] 0.0
        $region32: #{tpu_custom_call.1} parent=23 // pred_fallthru
          _
        %v159 = vld [vmem:[%s135] sm:$0xff]
        %v160 = vld [vmem:[%s135 + $0x8] sm:$0xff]
        %v161 = vld [vmem:[%s135 + $0x10] sm:$0xff]
        %v162 = vld [vmem:[%s135 + $0x18] sm:$0xff]
        %v163 = vld [vmem:[%s135 + $0x20] sm:$0xff]
        %v164 = vld [vmem:[%s135 + $0x28] sm:$0xff]
        %v165 = vld [vmem:[%s135 + $0x30] sm:$0xff]
        %v166 = vld [vmem:[%s135 + $0x38] sm:$0xff]
        %v167 = vld [vmem:[%s135 + $0x40] sm:$0xff]
        %v168 = vld [vmem:[%s135 + $0x48] sm:$0xff]
        %v169 = vld [vmem:[%s135 + $0x50] sm:$0xff]
        %v170 = vld [vmem:[%s135 + $0x58] sm:$0xff]
        %v171 = vld [vmem:[%s135 + $0x60] sm:$0xff]
        %v172 = vld [vmem:[%s135 + $0x68] sm:$0xff]
        %v173 = vld [vmem:[%s135 + $0x70] sm:$0xff]
        %v174 = vld [vmem:[%s135 + $0x78] sm:$0xff]
        %v175 = vld [vmem:[%s135 + $0x80] sm:$0xff]
        %v176 = vld [vmem:[%s135 + $0x88] sm:$0xff]
        %v177 = vld [vmem:[%s135 + $0x90] sm:$0xff]
        %v178 = vld [vmem:[%s135 + $0x98] sm:$0xff]
        %v179 = vld [vmem:[%s135 + $0xa0] sm:$0xff]
        %v180 = vld [vmem:[%s135 + $0xa8] sm:$0xff]
        %v181 = vld [vmem:[%s135 + $0xb0] sm:$0xff]
        %v182 = vld [vmem:[%s135 + $0xb8] sm:$0xff]
        %v183 = vld [vmem:[%s135 + $0xc0] sm:$0xff]
        %v184 = vld [vmem:[%s135 + $0xc8] sm:$0xff]
        %v185 = vld [vmem:[%s135 + $0xd0] sm:$0xff]
        %v186 = vld [vmem:[%s135 + $0xd8] sm:$0xff]
        %v187 = vld [vmem:[%s135 + $0xe0] sm:$0xff]
        %v188 = vld [vmem:[%s135 + $0xe8] sm:$0xff]
        %v189 = vld [vmem:[%s135 + $0xf0] sm:$0xff]
        %v190 = vld [vmem:[%s135 + $0xf8] sm:$0xff]
        %v191 = vld [vmem:[%s135 + $0x100] sm:$0xff]
        %v192 = vld [vmem:[%s135 + $0x108] sm:$0xff]
        %v193 = vld [vmem:[%s135 + $0x110] sm:$0xff]
        %v194 = vld [vmem:[%s135 + $0x118] sm:$0xff]
        %v195 = vld [vmem:[%s135 + $0x120] sm:$0xff]
        %v196 = vld [vmem:[%s135 + $0x128] sm:$0xff]
        %v197 = vld [vmem:[%s135 + $0x130] sm:$0xff]
        %v198 = vld [vmem:[%s135 + $0x138] sm:$0xff]
        %v199 = vld [vmem:[%s135 + $0x140] sm:$0xff]
        %v200 = vld [vmem:[%s135 + $0x148] sm:$0xff]
        %v201 = vld [vmem:[%s135 + $0x150] sm:$0xff]
        %v202 = vld [vmem:[%s135 + $0x158] sm:$0xff]
        %v203 = vld [vmem:[%s135 + $0x160] sm:$0xff]
        %v204 = vld [vmem:[%s135 + $0x168] sm:$0xff]
        %v205 = vld [vmem:[%s135 + $0x170] sm:$0xff]
        %v206 = vld [vmem:[%s135 + $0x178] sm:$0xff]
        %v207 = vld [vmem:[%s135 + $0x180] sm:$0xff]
        %v208 = vld [vmem:[%s135 + $0x188] sm:$0xff]
        %v209 = vld [vmem:[%s135 + $0x190] sm:$0xff]
        %v210 = vld [vmem:[%s135 + $0x198] sm:$0xff]
        %v211 = vld [vmem:[%s135 + $0x1a0] sm:$0xff]
        %v212 = vld [vmem:[%s135 + $0x1a8] sm:$0xff]
        %v213 = vld [vmem:[%s135 + $0x1b0] sm:$0xff]
        %v214 = vld [vmem:[%s135 + $0x1b8] sm:$0xff]
        %v215 = vld [vmem:[%s135 + $0x1c0] sm:$0xff]
        %v216 = vld [vmem:[%s135 + $0x1c8] sm:$0xff]
        %v217 = vld [vmem:[%s135 + $0x1d0] sm:$0xff]
        %v218 = vld [vmem:[%s135 + $0x1d8] sm:$0xff]
        %v219 = vld [vmem:[%s135 + $0x1e0] sm:$0xff]
        %v220 = vld [vmem:[%s135 + $0x1e8] sm:$0xff]
        %v221 = vld [vmem:[%s135 + $0x1f0] sm:$0xff]
        %v222 = vld [vmem:[%s135 + $0x1f8] sm:$0xff]
        %v223 = vld [vmem:[%s135 + $0x200] sm:$0xff]
        %v224 = vld [vmem:[%s135 + $0x208] sm:$0xff]
        %v225 = vld [vmem:[%s135 + $0x210] sm:$0xff]
        %v226 = vld [vmem:[%s135 + $0x218] sm:$0xff]
        %v227 = vld [vmem:[%s135 + $0x220] sm:$0xff]
        %v228 = vld [vmem:[%s135 + $0x228] sm:$0xff]
        %v229 = vld [vmem:[%s135 + $0x230] sm:$0xff]
        %v230 = vld [vmem:[%s135 + $0x238] sm:$0xff]
        %v231 = vld [vmem:[%s135 + $0x240] sm:$0xff]
        %v232 = vld [vmem:[%s135 + $0x248] sm:$0xff]
        %v233 = vld [vmem:[%s135 + $0x250] sm:$0xff]
        %v234 = vld [vmem:[%s135 + $0x258] sm:$0xff]
        %v235 = vld [vmem:[%s135 + $0x260] sm:$0xff]
        %v236 = vld [vmem:[%s135 + $0x268] sm:$0xff]
        %v237 = vld [vmem:[%s135 + $0x270] sm:$0xff]
        %v238 = vld [vmem:[%s135 + $0x278] sm:$0xff]
        %v239 = vld [vmem:[%s135 + $0x280] sm:$0xff]
        %v240 = vld [vmem:[%s135 + $0x288] sm:$0xff]
        %v241 = vld [vmem:[%s135 + $0x290] sm:$0xff]
        %v242 = vld [vmem:[%s135 + $0x298] sm:$0xff]
        %v243 = vld [vmem:[%s135 + $0x2a0] sm:$0xff]
        %v244 = vld [vmem:[%s135 + $0x2a8] sm:$0xff]
        %v245 = vld [vmem:[%s135 + $0x2b0] sm:$0xff]
        %v246 = vld [vmem:[%s135 + $0x2b8] sm:$0xff]
        %v247 = vld [vmem:[%s135 + $0x2c0] sm:$0xff]
        %v248 = vld [vmem:[%s135 + $0x2c8] sm:$0xff]
        %v249 = vld [vmem:[%s135 + $0x2d0] sm:$0xff]
        %v250 = vld [vmem:[%s135 + $0x2d8] sm:$0xff]
        %v251 = vld [vmem:[%s135 + $0x2e0] sm:$0xff]
        %v252 = vld [vmem:[%s135 + $0x2e8] sm:$0xff]
        %v253 = vld [vmem:[%s135 + $0x2f0] sm:$0xff]
        %v254 = vld [vmem:[%s135 + $0x2f8] sm:$0xff]
        %v255 = vld [vmem:[%s135 + $0x300] sm:$0xff]
        %v256 = vld [vmem:[%s135 + $0x308] sm:$0xff]
        %v257 = vld [vmem:[%s135 + $0x310] sm:$0xff]
        %v258 = vld [vmem:[%s135 + $0x318] sm:$0xff]
        %v259 = vld [vmem:[%s135 + $0x320] sm:$0xff]
        %v260 = vld [vmem:[%s135 + $0x328] sm:$0xff]
        %v261 = vld [vmem:[%s135 + $0x330] sm:$0xff]
        %v262 = vld [vmem:[%s135 + $0x338] sm:$0xff]
        %v263 = vld [vmem:[%s135 + $0x340] sm:$0xff]
        %v264 = vld [vmem:[%s135 + $0x348] sm:$0xff]
        %v265 = vld [vmem:[%s135 + $0x350] sm:$0xff]
        %v266 = vld [vmem:[%s135 + $0x358] sm:$0xff]
        %v267 = vld [vmem:[%s135 + $0x360] sm:$0xff]
        %v268 = vld [vmem:[%s135 + $0x368] sm:$0xff]
        %v269 = vld [vmem:[%s135 + $0x370] sm:$0xff]
        %v270 = vld [vmem:[%s135 + $0x378] sm:$0xff]
        %v271 = vld [vmem:[%s135 + $0x380] sm:$0xff]
        %v272 = vld [vmem:[%s135 + $0x388] sm:$0xff]
        %v273 = vld [vmem:[%s135 + $0x390] sm:$0xff]
        %v274 = vld [vmem:[%s135 + $0x398] sm:$0xff]
        %v275 = vld [vmem:[%s135 + $0x3a0] sm:$0xff]
        %v276 = vld [vmem:[%s135 + $0x3a8] sm:$0xff]
        %v277 = vld [vmem:[%s135 + $0x3b0] sm:$0xff]
        %v278 = vld [vmem:[%s135 + $0x3b8] sm:$0xff]
        %v279 = vld [vmem:[%s135 + $0x3c0] sm:$0xff]
        %v280 = vld [vmem:[%s135 + $0x3c8] sm:$0xff]
        %v281 = vld [vmem:[%s135 + $0x3d0] sm:$0xff]
        %v282 = vld [vmem:[%s135 + $0x3d8] sm:$0xff]
        %v283 = vld [vmem:[%s135 + $0x3e0] sm:$0xff]
        %v284 = vld [vmem:[%s135 + $0x3e8] sm:$0xff]
        %v285 = vld [vmem:[%s135 + $0x3f0] sm:$0xff]
        %v286 = vld [vmem:[%s135 + $0x3f8] sm:$0xff]
        %v287 = vld [vmem:[#allocation5] sm:$0xff]
        %v288 = vadd.f32 %v159, %v167
        %v289 = vadd.f32 %v288, %v175
        %v290 = vadd.f32 %v289, %v183
        %v291 = vadd.f32 %v290, %v191
        %v292 = vadd.f32 %v291, %v199
        %v293 = vadd.f32 %v292, %v207
        %v294 = vadd.f32 %v293, %v215
        %v295 = vadd.f32 %v294, %v223
        %v296 = vadd.f32 %v295, %v231
        %v297 = vadd.f32 %v296, %v239
        %v298 = vadd.f32 %v297, %v247
        %v299 = vadd.f32 %v298, %v255
        %v300 = vadd.f32 %v299, %v263
        %v301 = vadd.f32 %v300, %v271
        %v302 = vadd.f32 %v301, %v279
        %v303 = vrot.slane %v302, 4
        %v304 = vadd.f32 %v302, %v303
        %v305 = vrot.slane %v304, 2
        %v306 = vadd.f32 %v304, %v305
        %v307 = vrot.slane %v306, 1
        %v308 = vadd.f32 %v306, %v307
        %v309 = vadd.f32 %v160, %v168
        %v310 = vadd.f32 %v309, %v176
        %v311 = vadd.f32 %v310, %v184
        %v312 = vadd.f32 %v311, %v192
        %v313 = vadd.f32 %v312, %v200
        %v314 = vadd.f32 %v313, %v208
        %v315 = vadd.f32 %v314, %v216
        %v316 = vadd.f32 %v315, %v224
        %v317 = vadd.f32 %v316, %v232
        %v318 = vadd.f32 %v317, %v240
        %v319 = vadd.f32 %v318, %v248
        %v320 = vadd.f32 %v319, %v256
        %v321 = vadd.f32 %v320, %v264
        %v322 = vadd.f32 %v321, %v272
        %v323 = vadd.f32 %v322, %v280
        %v324 = vrot.slane %v323, 4
        %v325 = vadd.f32 %v323, %v324
        %v326 = vrot.slane %v325, 2
        %v327 = vadd.f32 %v325, %v326
        %v328 = vrot.slane %v327, 1
        %v329 = vadd.f32 %v327, %v328
        %v330 = vadd.f32 %v161, %v169
        %v331 = vadd.f32 %v330, %v177
        %v332 = vadd.f32 %v331, %v185
        %v333 = vadd.f32 %v332, %v193
        %v334 = vadd.f32 %v333, %v201
        %v335 = vadd.f32 %v334, %v209
        %v336 = vadd.f32 %v335, %v217
        %v337 = vadd.f32 %v336, %v225
        %v338 = vadd.f32 %v337, %v233
        %v339 = vadd.f32 %v338, %v241
        %v340 = vadd.f32 %v339, %v249
        %v341 = vadd.f32 %v340, %v257
        %v342 = vadd.f32 %v341, %v265
        %v343 = vadd.f32 %v342, %v273
        %v344 = vadd.f32 %v343, %v281
        %v345 = vrot.slane %v344, 4
        %v346 = vadd.f32 %v344, %v345
        %v347 = vrot.slane %v346, 2
        %v348 = vadd.f32 %v346, %v347
        %v349 = vrot.slane %v348, 1
        %v350 = vadd.f32 %v348, %v349
        %v351 = vadd.f32 %v162, %v170
        %v352 = vadd.f32 %v351, %v178
        %v353 = vadd.f32 %v352, %v186
        %v354 = vadd.f32 %v353, %v194
        %v355 = vadd.f32 %v354, %v202
        %v356 = vadd.f32 %v355, %v210
        %v357 = vadd.f32 %v356, %v218
        %v358 = vadd.f32 %v357, %v226
        %v359 = vadd.f32 %v358, %v234
        %v360 = vadd.f32 %v359, %v242
        %v361 = vadd.f32 %v360, %v250
        %v362 = vadd.f32 %v361, %v258
        %v363 = vadd.f32 %v362, %v266
        %v364 = vadd.f32 %v363, %v274
        %v365 = vadd.f32 %v364, %v282
        %v366 = vrot.slane %v365, 4
        %v367 = vadd.f32 %v365, %v366
        %v368 = vrot.slane %v367, 2
        %v369 = vadd.f32 %v367, %v368
        %v370 = vrot.slane %v369, 1
        %v371 = vadd.f32 %v369, %v370
        %v372 = vadd.f32 %v163, %v171
        %v373 = vadd.f32 %v372, %v179
        %v374 = vadd.f32 %v373, %v187
        %v375 = vadd.f32 %v374, %v195
        %v376 = vadd.f32 %v375, %v203
        %v377 = vadd.f32 %v376, %v211
        %v378 = vadd.f32 %v377, %v219
        %v379 = vadd.f32 %v378, %v227
        %v380 = vadd.f32 %v379, %v235
        %v381 = vadd.f32 %v380, %v243
        %v382 = vadd.f32 %v381, %v251
        %v383 = vadd.f32 %v382, %v259
        %v384 = vadd.f32 %v383, %v267
        %v385 = vadd.f32 %v384, %v275
        %v386 = vadd.f32 %v385, %v283
        %v387 = vrot.slane %v386, 4
        %v388 = vadd.f32 %v386, %v387
        %v389 = vrot.slane %v388, 2
        %v390 = vadd.f32 %v388, %v389
        %v391 = vrot.slane %v390, 1
        %v392 = vadd.f32 %v390, %v391
        %v393 = vadd.f32 %v164, %v172
        %v394 = vadd.f32 %v393, %v180
        %v395 = vadd.f32 %v394, %v188
        %v396 = vadd.f32 %v395, %v196
        %v397 = vadd.f32 %v396, %v204
        %v398 = vadd.f32 %v397, %v212
        %v399 = vadd.f32 %v398, %v220
        %v400 = vadd.f32 %v399, %v228
        %v401 = vadd.f32 %v400, %v236
        %v402 = vadd.f32 %v401, %v244
        %v403 = vadd.f32 %v402, %v252
        %v404 = vadd.f32 %v403, %v260
        %v405 = vadd.f32 %v404, %v268
        %v406 = vadd.f32 %v405, %v276
        %v407 = vadd.f32 %v406, %v284
        %v408 = vrot.slane %v407, 4
        %v409 = vadd.f32 %v407, %v408
        %v410 = vrot.slane %v409, 2
        %v411 = vadd.f32 %v409, %v410
        %v412 = vrot.slane %v411, 1
        %v413 = vadd.f32 %v411, %v412
        %v414 = vadd.f32 %v165, %v173
        %v415 = vadd.f32 %v414, %v181
        %v416 = vadd.f32 %v415, %v189
        %v417 = vadd.f32 %v416, %v197
        %v418 = vadd.f32 %v417, %v205
        %v419 = vadd.f32 %v418, %v213
        %v420 = vadd.f32 %v419, %v221
        %v421 = vadd.f32 %v420, %v229
        %v422 = vadd.f32 %v421, %v237
        %v423 = vadd.f32 %v422, %v245
        %v424 = vadd.f32 %v423, %v253
        %v425 = vadd.f32 %v424, %v261
        %v426 = vadd.f32 %v425, %v269
        %v427 = vadd.f32 %v426, %v277
        %v428 = vadd.f32 %v427, %v285
        %v429 = vrot.slane %v428, 4
        %v430 = vadd.f32 %v428, %v429
        %v431 = vrot.slane %v430, 2
        %v432 = vadd.f32 %v430, %v431
        %v433 = vrot.slane %v432, 1
        %v434 = vadd.f32 %v432, %v433
        %v435 = vadd.f32 %v166, %v174
        %v436 = vadd.f32 %v435, %v182
        %v437 = vadd.f32 %v436, %v190
        %v438 = vadd.f32 %v437, %v198
        %v439 = vadd.f32 %v438, %v206
        %v440 = vadd.f32 %v439, %v214
        %v441 = vadd.f32 %v440, %v222
        %v442 = vadd.f32 %v441, %v230
        %v443 = vadd.f32 %v442, %v238
        %v444 = vadd.f32 %v443, %v246
        %v445 = vadd.f32 %v444, %v254
        %v446 = vadd.f32 %v445, %v262
        %v447 = vadd.f32 %v446, %v270
        %v448 = vadd.f32 %v447, %v278
        %v449 = vadd.f32 %v448, %v286
        %v450 = vrot.slane %v449, 4
        %v451 = vadd.f32 %v449, %v450
        %v452 = vrot.slane %v451, 2
        %v453 = vadd.f32 %v451, %v452
        %v454 = vrot.slane %v453, 1
        %v455 = vadd.f32 %v453, %v454
        %v464 = vrot.slane %v329, 7
        %v465 = vrot.slane %v350, 6
        %v466 = vrot.slane %v371, 5
        %v467 = vrot.slane %v392, 4
        %v468 = vrot.slane %v413, 3
        %v469 = vrot.slane %v434, 2
        %v470 = vrot.slane %v455, 1
        %vm471 = vcmask 1040384
        %v472 = vsel %vm471, %v308, %v464
        %vm473 = vcmask 1042434
        %v474 = vsel %vm473, %v465, %v466
        %vm475 = vcmask 1041408
        %v476 = vsel %vm475, %v472, %v474
        %vm477 = vcmask 1044484
        %v478 = vsel %vm477, %v467, %v468
        %vm479 = vcmask 1046534
        %v480 = vsel %vm479, %v469, %v470
        %vm481 = vcmask 1045508
        %v482 = vsel %vm481, %v478, %v480
        %vm483 = vcmask 1043456
        %v484 = vsel %vm483, %v476, %v482
        %v486 = vadd.f32 %v287, %v484
        %487 = vst [vmem:[#allocation5] sm:$0xff] %v486
        %v488 = vld [vmem:[#allocation6] sm:$0xff]
        %v489 = vmul.f32 %v159, %v159
        %v490 = vmul.f32 %v160, %v160
        %v491 = vmul.f32 %v161, %v161
        %v492 = vmul.f32 %v162, %v162
        %v493 = vmul.f32 %v163, %v163
        %v494 = vmul.f32 %v164, %v164
        %v495 = vmul.f32 %v165, %v165
        %v496 = vmul.f32 %v166, %v166
        %v497 = vmul.f32 %v167, %v167
        %v498 = vmul.f32 %v168, %v168
        %v499 = vmul.f32 %v169, %v169
        %v500 = vmul.f32 %v170, %v170
        %v501 = vmul.f32 %v171, %v171
        %v502 = vmul.f32 %v172, %v172
        %v503 = vmul.f32 %v173, %v173
        %v504 = vmul.f32 %v174, %v174
        %v505 = vmul.f32 %v175, %v175
        %v506 = vmul.f32 %v176, %v176
        %v507 = vmul.f32 %v177, %v177
        %v508 = vmul.f32 %v178, %v178
        %v509 = vmul.f32 %v179, %v179
        %v510 = vmul.f32 %v180, %v180
        %v511 = vmul.f32 %v181, %v181
        %v512 = vmul.f32 %v182, %v182
        %v513 = vmul.f32 %v183, %v183
        %v514 = vmul.f32 %v184, %v184
        %v515 = vmul.f32 %v185, %v185
        %v516 = vmul.f32 %v186, %v186
        %v517 = vmul.f32 %v187, %v187
        %v518 = vmul.f32 %v188, %v188
        %v519 = vmul.f32 %v189, %v189
        %v520 = vmul.f32 %v190, %v190
        %v521 = vmul.f32 %v191, %v191
        %v522 = vmul.f32 %v192, %v192
        %v523 = vmul.f32 %v193, %v193
        %v524 = vmul.f32 %v194, %v194
        %v525 = vmul.f32 %v195, %v195
        %v526 = vmul.f32 %v196, %v196
        %v527 = vmul.f32 %v197, %v197
        %v528 = vmul.f32 %v198, %v198
        %v529 = vmul.f32 %v199, %v199
        %v530 = vmul.f32 %v200, %v200
        %v531 = vmul.f32 %v201, %v201
        %v532 = vmul.f32 %v202, %v202
        %v533 = vmul.f32 %v203, %v203
        %v534 = vmul.f32 %v204, %v204
        %v535 = vmul.f32 %v205, %v205
        %v536 = vmul.f32 %v206, %v206
        %v537 = vmul.f32 %v207, %v207
        %v538 = vmul.f32 %v208, %v208
        %v539 = vmul.f32 %v209, %v209
        %v540 = vmul.f32 %v210, %v210
        %v541 = vmul.f32 %v211, %v211
        %v542 = vmul.f32 %v212, %v212
        %v543 = vmul.f32 %v213, %v213
        %v544 = vmul.f32 %v214, %v214
        %v545 = vmul.f32 %v215, %v215
        %v546 = vmul.f32 %v216, %v216
        %v547 = vmul.f32 %v217, %v217
        %v548 = vmul.f32 %v218, %v218
        %v549 = vmul.f32 %v219, %v219
        %v550 = vmul.f32 %v220, %v220
        %v551 = vmul.f32 %v221, %v221
        %v552 = vmul.f32 %v222, %v222
        %v553 = vmul.f32 %v223, %v223
        %v554 = vmul.f32 %v224, %v224
        %v555 = vmul.f32 %v225, %v225
        %v556 = vmul.f32 %v226, %v226
        %v557 = vmul.f32 %v227, %v227
        %v558 = vmul.f32 %v228, %v228
        %v559 = vmul.f32 %v229, %v229
        %v560 = vmul.f32 %v230, %v230
        %v561 = vmul.f32 %v231, %v231
        %v562 = vmul.f32 %v232, %v232
        %v563 = vmul.f32 %v233, %v233
        %v564 = vmul.f32 %v234, %v234
        %v565 = vmul.f32 %v235, %v235
        %v566 = vmul.f32 %v236, %v236
        %v567 = vmul.f32 %v237, %v237
        %v568 = vmul.f32 %v238, %v238
        %v569 = vmul.f32 %v239, %v239
        %v570 = vmul.f32 %v240, %v240
        %v571 = vmul.f32 %v241, %v241
        %v572 = vmul.f32 %v242, %v242
        %v573 = vmul.f32 %v243, %v243
        %v574 = vmul.f32 %v244, %v244
        %v575 = vmul.f32 %v245, %v245
        %v576 = vmul.f32 %v246, %v246
        %v577 = vmul.f32 %v247, %v247
        %v578 = vmul.f32 %v248, %v248
        %v579 = vmul.f32 %v249, %v249
        %v580 = vmul.f32 %v250, %v250
        %v581 = vmul.f32 %v251, %v251
        %v582 = vmul.f32 %v252, %v252
        %v583 = vmul.f32 %v253, %v253
        %v584 = vmul.f32 %v254, %v254
        %v585 = vmul.f32 %v255, %v255
        %v586 = vmul.f32 %v256, %v256
        %v587 = vmul.f32 %v257, %v257
        %v588 = vmul.f32 %v258, %v258
        %v589 = vmul.f32 %v259, %v259
        %v590 = vmul.f32 %v260, %v260
        %v591 = vmul.f32 %v261, %v261
        %v592 = vmul.f32 %v262, %v262
        %v593 = vmul.f32 %v263, %v263
        %v594 = vmul.f32 %v264, %v264
        %v595 = vmul.f32 %v265, %v265
        %v596 = vmul.f32 %v266, %v266
        %v597 = vmul.f32 %v267, %v267
        %v598 = vmul.f32 %v268, %v268
        %v599 = vmul.f32 %v269, %v269
        %v600 = vmul.f32 %v270, %v270
        %v601 = vmul.f32 %v271, %v271
        %v602 = vmul.f32 %v272, %v272
        %v603 = vmul.f32 %v273, %v273
        %v604 = vmul.f32 %v274, %v274
        %v605 = vmul.f32 %v275, %v275
        %v606 = vmul.f32 %v276, %v276
        %v607 = vmul.f32 %v277, %v277
        %v608 = vmul.f32 %v278, %v278
        %v609 = vmul.f32 %v279, %v279
        %v610 = vmul.f32 %v280, %v280
        %v611 = vmul.f32 %v281, %v281
        %v612 = vmul.f32 %v282, %v282
        %v613 = vmul.f32 %v283, %v283
        %v614 = vmul.f32 %v284, %v284
        %v615 = vmul.f32 %v285, %v285
        %v616 = vmul.f32 %v286, %v286
        %v617 = vadd.f32 %v489, %v497
        %v618 = vadd.f32 %v617, %v505
        %v619 = vadd.f32 %v618, %v513
        %v620 = vadd.f32 %v619, %v521
        %v621 = vadd.f32 %v620, %v529
        %v622 = vadd.f32 %v621, %v537
        %v623 = vadd.f32 %v622, %v545
        %v624 = vadd.f32 %v623, %v553
        %v625 = vadd.f32 %v624, %v561
        %v626 = vadd.f32 %v625, %v569
        %v627 = vadd.f32 %v626, %v577
        %v628 = vadd.f32 %v627, %v585
        %v629 = vadd.f32 %v628, %v593
        %v630 = vadd.f32 %v629, %v601
        %v631 = vadd.f32 %v630, %v609
        %v632 = vrot.slane %v631, 4
        %v633 = vadd.f32 %v631, %v632
        %v634 = vrot.slane %v633, 2
        %v635 = vadd.f32 %v633, %v634
        %v636 = vrot.slane %v635, 1
        %v637 = vadd.f32 %v635, %v636
        %v638 = vadd.f32 %v490, %v498
        %v639 = vadd.f32 %v638, %v506
        %v640 = vadd.f32 %v639, %v514
        %v641 = vadd.f32 %v640, %v522
        %v642 = vadd.f32 %v641, %v530
        %v643 = vadd.f32 %v642, %v538
        %v644 = vadd.f32 %v643, %v546
        %v645 = vadd.f32 %v644, %v554
        %v646 = vadd.f32 %v645, %v562
        %v647 = vadd.f32 %v646, %v570
        %v648 = vadd.f32 %v647, %v578
        %v649 = vadd.f32 %v648, %v586
        %v650 = vadd.f32 %v649, %v594
        %v651 = vadd.f32 %v650, %v602
        %v652 = vadd.f32 %v651, %v610
        %v653 = vrot.slane %v652, 4
        %v654 = vadd.f32 %v652, %v653
        %v655 = vrot.slane %v654, 2
        %v656 = vadd.f32 %v654, %v655
        %v657 = vrot.slane %v656, 1
        %v658 = vadd.f32 %v656, %v657
        %v659 = vadd.f32 %v491, %v499
        %v660 = vadd.f32 %v659, %v507
        %v661 = vadd.f32 %v660, %v515
        %v662 = vadd.f32 %v661, %v523
        %v663 = vadd.f32 %v662, %v531
        %v664 = vadd.f32 %v663, %v539
        %v665 = vadd.f32 %v664, %v547
        %v666 = vadd.f32 %v665, %v555
        %v667 = vadd.f32 %v666, %v563
        %v668 = vadd.f32 %v667, %v571
        %v669 = vadd.f32 %v668, %v579
        %v670 = vadd.f32 %v669, %v587
        %v671 = vadd.f32 %v670, %v595
        %v672 = vadd.f32 %v671, %v603
        %v673 = vadd.f32 %v672, %v611
        %v674 = vrot.slane %v673, 4
        %v675 = vadd.f32 %v673, %v674
        %v676 = vrot.slane %v675, 2
        %v677 = vadd.f32 %v675, %v676
        %v678 = vrot.slane %v677, 1
        %v679 = vadd.f32 %v677, %v678
        %v680 = vadd.f32 %v492, %v500
        %v681 = vadd.f32 %v680, %v508
        %v682 = vadd.f32 %v681, %v516
        %v683 = vadd.f32 %v682, %v524
        %v684 = vadd.f32 %v683, %v532
        %v685 = vadd.f32 %v684, %v540
        %v686 = vadd.f32 %v685, %v548
        %v687 = vadd.f32 %v686, %v556
        %v688 = vadd.f32 %v687, %v564
        %v689 = vadd.f32 %v688, %v572
        %v690 = vadd.f32 %v689, %v580
        %v691 = vadd.f32 %v690, %v588
        %v692 = vadd.f32 %v691, %v596
        %v693 = vadd.f32 %v692, %v604
        %v694 = vadd.f32 %v693, %v612
        %v695 = vrot.slane %v694, 4
        %v696 = vadd.f32 %v694, %v695
        %v697 = vrot.slane %v696, 2
        %v698 = vadd.f32 %v696, %v697
        %v699 = vrot.slane %v698, 1
        %v700 = vadd.f32 %v698, %v699
        %v701 = vadd.f32 %v493, %v501
        %v702 = vadd.f32 %v701, %v509
        %v703 = vadd.f32 %v702, %v517
        %v704 = vadd.f32 %v703, %v525
        %v705 = vadd.f32 %v704, %v533
        %v706 = vadd.f32 %v705, %v541
        %v707 = vadd.f32 %v706, %v549
        %v708 = vadd.f32 %v707, %v557
        %v709 = vadd.f32 %v708, %v565
        %v710 = vadd.f32 %v709, %v573
        %v711 = vadd.f32 %v710, %v581
        %v712 = vadd.f32 %v711, %v589
        %v713 = vadd.f32 %v712, %v597
        %v714 = vadd.f32 %v713, %v605
        %v715 = vadd.f32 %v714, %v613
        %v716 = vrot.slane %v715, 4
        %v717 = vadd.f32 %v715, %v716
        %v718 = vrot.slane %v717, 2
        %v719 = vadd.f32 %v717, %v718
        %v720 = vrot.slane %v719, 1
        %v721 = vadd.f32 %v719, %v720
        %v722 = vadd.f32 %v494, %v502
        %v723 = vadd.f32 %v722, %v510
        %v724 = vadd.f32 %v723, %v518
        %v725 = vadd.f32 %v724, %v526
        %v726 = vadd.f32 %v725, %v534
        %v727 = vadd.f32 %v726, %v542
        %v728 = vadd.f32 %v727, %v550
        %v729 = vadd.f32 %v728, %v558
        %v730 = vadd.f32 %v729, %v566
        %v731 = vadd.f32 %v730, %v574
        %v732 = vadd.f32 %v731, %v582
        %v733 = vadd.f32 %v732, %v590
        %v734 = vadd.f32 %v733, %v598
        %v735 = vadd.f32 %v734, %v606
        %v736 = vadd.f32 %v735, %v614
        %v737 = vrot.slane %v736, 4
        %v738 = vadd.f32 %v736, %v737
        %v739 = vrot.slane %v738, 2
        %v740 = vadd.f32 %v738, %v739
        %v741 = vrot.slane %v740, 1
        %v742 = vadd.f32 %v740, %v741
        %v743 = vadd.f32 %v495, %v503
        %v744 = vadd.f32 %v743, %v511
        %v745 = vadd.f32 %v744, %v519
        %v746 = vadd.f32 %v745, %v527
        %v747 = vadd.f32 %v746, %v535
        %v748 = vadd.f32 %v747, %v543
        %v749 = vadd.f32 %v748, %v551
        %v750 = vadd.f32 %v749, %v559
        %v751 = vadd.f32 %v750, %v567
        %v752 = vadd.f32 %v751, %v575
        %v753 = vadd.f32 %v752, %v583
        %v754 = vadd.f32 %v753, %v591
        %v755 = vadd.f32 %v754, %v599
        %v756 = vadd.f32 %v755, %v607
        %v757 = vadd.f32 %v756, %v615
        %v758 = vrot.slane %v757, 4
        %v759 = vadd.f32 %v757, %v758
        %v760 = vrot.slane %v759, 2
        %v761 = vadd.f32 %v759, %v760
        %v762 = vrot.slane %v761, 1
        %v763 = vadd.f32 %v761, %v762
        %v764 = vadd.f32 %v496, %v504
        %v765 = vadd.f32 %v764, %v512
        %v766 = vadd.f32 %v765, %v520
        %v767 = vadd.f32 %v766, %v528
        %v768 = vadd.f32 %v767, %v536
        %v769 = vadd.f32 %v768, %v544
        %v770 = vadd.f32 %v769, %v552
        %v771 = vadd.f32 %v770, %v560
        %v772 = vadd.f32 %v771, %v568
        %v773 = vadd.f32 %v772, %v576
        %v774 = vadd.f32 %v773, %v584
        %v775 = vadd.f32 %v774, %v592
        %v776 = vadd.f32 %v775, %v600
        %v777 = vadd.f32 %v776, %v608
        %v778 = vadd.f32 %v777, %v616
        %v779 = vrot.slane %v778, 4
        %v780 = vadd.f32 %v778, %v779
        %v781 = vrot.slane %v780, 2
        %v782 = vadd.f32 %v780, %v781
        %v783 = vrot.slane %v782, 1
        %v784 = vadd.f32 %v782, %v783
        %v793 = vrot.slane %v658, 7
        %v794 = vrot.slane %v679, 6
        %v795 = vrot.slane %v700, 5
        %v796 = vrot.slane %v721, 4
        %v797 = vrot.slane %v742, 3
        %v798 = vrot.slane %v763, 2
        %v799 = vrot.slane %v784, 1
        %v800 = vsel %vm471, %v637, %v793
        %v801 = vsel %vm473, %v794, %v795
        %v802 = vsel %vm475, %v800, %v801
        %v803 = vsel %vm477, %v796, %v797
        %v804 = vsel %vm479, %v798, %v799
        %v805 = vsel %vm481, %v803, %v804
        %v806 = vsel %vm483, %v802, %v805
        %v808 = vadd.f32 %v488, %v806
        %809 = vst [vmem:[#allocation6] sm:$0xff] %v808
        // Predicated region
        $region33: #{tpu_custom_call.1} parent=23 // pred_check
          %p810 = pneg %p58
        $region34: #{tpu_custom_call.1} parent=23 // pred_check_branch
          %812 = sbr.rel (%p810) target = $region36
        $region35: #{tpu_custom_call.1} parent=23 // pred_region
          %814 = vsyncadd [#allocation4], 0
          %s816 = sshll.u32 [#allocation5], 4
          %s817 = int_to_ptr.vmem [resolvable:$true] %s816
          %s818 = sshll.u32 %s1, 4
          %s819 = int_to_ptr.hbm [resolvable:$true] %s818
          %821 = dma.vmem_to_hbm [thread:$0]  %s817, 128, %s819, [#allocation4]
        $region36: #{tpu_custom_call.1} parent=23 // pred_fallthru
          _
        // Predicated region
        $region37: #{tpu_custom_call.1} parent=23 // pred_check
          %p822 = pneg %p79
        $region38: #{tpu_custom_call.1} parent=23 // pred_check_branch
          %824 = sbr.rel (%p822) target = $region40
        $region39: #{tpu_custom_call.1} parent=23 // pred_region
          %826 = vsyncadd [#allocation7], 0
          %s828 = sshll.u32 [#allocation6], 4
          %s829 = int_to_ptr.vmem [resolvable:$true] %s828
          %s830 = sshll.u32 %s2, 4
          %s831 = int_to_ptr.hbm [resolvable:$true] %s830
          %833 = dma.vmem_to_hbm [thread:$0]  %s829, 128, %s831, [#allocation7]
        $region40: #{tpu_custom_call.1} parent=23 // pred_fallthru
          _
        // Predicated region
        $region41: #{tpu_custom_call.1} parent=23 // pred_check
          %p834 = pneg %p58
        $region42: #{tpu_custom_call.1} parent=23 // pred_check_branch
          %836 = sbr.rel (%p834) target = $region44
        $region43: #{tpu_custom_call.1} parent=23 // pred_region
          %838 = dma.done [#allocation4], 128
        $region44: #{tpu_custom_call.1} parent=23 // pred_fallthru
          _
        // Predicated region
        $region45: #{tpu_custom_call.1} parent=23 // pred_check
          %p839 = pneg %p79
        $region46: #{tpu_custom_call.1} parent=23 // pred_check_branch
          %841 = sbr.rel (%p839) target = $region48
        $region47: #{tpu_custom_call.1} parent=23 // pred_region
          %843 = dma.done [#allocation7], 128
        $region48: #{tpu_custom_call.1} parent=23 // pred_fallthru
          _
      $region24: #{tpu_custom_call.1} parent=5 // pred_fallthru
        _
      %p844 = scmp.le.s32.totalorder 2, %s14
      // Predicated region
      $region49: #{tpu_custom_call.1} parent=5 // pred_check
        %p845 = pneg %p844
      $region50: #{tpu_custom_call.1} parent=5 // pred_check_branch
        %847 = sbr.rel (%p845) target = $region52
      $region51: #{tpu_custom_call.1} parent=5 // pred_region
        %s848 = ssub.s32 %s14, 2
      $region52: #{tpu_custom_call.1} parent=5 // pred_fallthru
        _
    $region6: #{tpu_custom_call.1} parent=1 // loop_footer
      %s18 = sadd.s32 1, %s14
    $region7: #{tpu_custom_call.1} parent=1 // loop_footer_branch
      %13 = sbr.rel target = $region3
    $region8: #{tpu_custom_call.1} parent=1 // loop_exit
      _
    %849 = vsyncpa [#allocation3], 1
    %s850 = scalar_lea.sflag [#allocation3], 1
    %851 = vsyncpa %s850, 1
    %852 = vsyncpa [#allocation4], 1
    %s853 = scalar_lea.sflag [#allocation4], 1
    %854 = vsyncpa %s853, 1
    %855 = vsyncpa [#allocation7], 1

</llo_original>
